<compile_context>
chip_gen: v6e
topology: v6e:2x2x1
jax: 0.10.0
libtpu: 0.0.40
codegen_flags: <defaults>
</compile_context>

<pallas_src>
import jax
import jax.numpy as jnp
from jax.experimental import pallas as pl
from jax.experimental.pallas import tpu as pltpu


def _conv_mish_kernel(xa_ref, xb_ref, w_ref, b_ref, o_ref):
    # xa_ref: (1, TH, W+2, Cin)   rows [ht*TH, ht*TH+TH) of the padded input
    # xb_ref: (1, 8,  W+2, Cin)   next 8 padded rows (only first 2 used = halo)
    # w_ref:  (9*Cin, Cout)       conv weights, rows ordered (kh, kw, ci)
    # b_ref:  (1, Cout)           bias
    # o_ref:  (1, TH, W, Cout)    mish(conv(x) + b) for this row tile
    th = o_ref.shape[1]
    w_cols = o_ref.shape[2]
    cout = o_ref.shape[3]
    cin = xa_ref.shape[3]

    xa = xa_ref[0, :, :, :]                       # (TH, W+2, Cin)
    xb = xb_ref[0, 0:2, :, :]                     # (2,  W+2, Cin) halo rows
    rows = jnp.concatenate([xa, xb], axis=0)      # (TH+2, W+2, Cin)

    # im2col: 9 shifted taps concatenated along channels -> one deep-K matmul.
    taps = [rows[kh:kh + th, kw:kw + w_cols, :]
            for kh in range(3) for kw in range(3)]
    patches = jnp.concatenate(taps, axis=-1)      # (TH, W, 9*Cin)
    patches = patches.reshape(th * w_cols, 9 * cin)

    y = jnp.dot(patches, w_ref[...], preferred_element_type=jnp.float32)
    y = y + b_ref[0].astype(jnp.float32)          # (TH*W, Cout)

    # Fast mish: y * tanh(softplus(y)) = y * ((1+t)^2 - 1) / ((1+t)^2 + 1), t=e^y.
    # Single exp on the EUP; reciprocal via approx vrcp + one Newton step (VPU).
    t = jnp.exp(jnp.minimum(y, 20.0))             # clamp avoids overflow of t^2
    num = t * (t + 2.0)                           # (1+t)^2 - 1, cancellation-free
    den = num + 2.0                               # (1+t)^2 + 1
    inv = pl.reciprocal(den, approx=True)
    inv = inv * (2.0 - den * inv)                 # Newton refine -> ~f32 accuracy
    y = y * num * inv

    o_ref[0] = y.reshape(th, w_cols, cout).astype(o_ref.dtype)


def upsample_block(x_nchw, weight_oihw, bias, up_scale, *, tile_h=8):
    """Forward pass of UpsampleBLock.

    x_nchw:      (N, Cin, H, W)          float32
    weight_oihw: (Cin*r*r, Cin, 3, 3)    float32 (PyTorch conv layout)
    bias:        (Cin*r*r,)              float32
    returns:     (N, Cin, H*r, W*r)      float32 (matches PyTorch NCHW output)
    """
    N, Cin, H, W = x_nchw.shape
    r = up_scale
    Cout = Cin * r * r
    assert weight_oihw.shape == (Cout, Cin, 3, 3)

    TH = min(tile_h, H)
    assert TH % 8 == 0 and H % TH == 0, "row tile must be a multiple of 8 dividing H"
    HT = H // TH
    th8 = TH // 8

    # NCHW -> NHWC (input is r^2 times smaller than the output, so this pass is cheap).
    x_nhwc = jnp.transpose(x_nchw, (0, 2, 3, 1))
    # Conv padding=1 plus extra bottom rows so the shifted halo BlockSpec stays in range.
    x_pad = jnp.pad(x_nhwc, ((0, 0), (1, TH - 1), (1, 1), (0, 0)))  # (N, H+TH, W+2, Cin)

    # OIHW -> (kh, kw, ci) x Cout, matching the im2col concatenation order.
    w_flat = jnp.transpose(weight_oihw, (2, 3, 1, 0)).reshape(9 * Cin, Cout)
    b2d = bias.reshape(1, Cout)

    conv_mish = pl.pallas_call(
        _conv_mish_kernel,
        out_shape=jax.ShapeDtypeStruct((N, H, W, Cout), x_nchw.dtype),
        grid_spec=pltpu.PrefetchScalarGridSpec(
            num_scalar_prefetch=0,
            grid=(N, HT),
            in_specs=[
                # Row tile of the padded input.
                pl.BlockSpec((1, TH, W + 2, Cin), lambda n, ht: (n, ht, 0, 0)),
                # Shifted view of the SAME array: the next 8 rows supply the 2-row halo.
                pl.BlockSpec((1, 8, W + 2, Cin),
                             lambda n, ht: (n, (ht + 1) * th8, 0, 0)),
                pl.BlockSpec((9 * Cin, Cout), lambda n, ht: (0, 0)),
                pl.BlockSpec((1, Cout), lambda n, ht: (0, 0)),
            ],
            out_specs=pl.BlockSpec((1, TH, W, Cout), lambda n, ht: (n, ht, 0, 0)),
        ),
        compiler_params=pltpu.CompilerParams(
            dimension_semantics=("parallel", "parallel"),
            vmem_limit_bytes=32 * 1024 * 1024),
    )
    y = conv_mish(x_pad, x_pad, w_flat, b2d)   # (N, H, W, Cout), mish already applied

    # PixelShuffle + NHWC->NCHW: one fused XLA transpose.
    # TODO(synk): fuse into the kernel store (needs stride-r sub-tile interleave).
    y = y.reshape(N, H, W, Cin, r, r)           # (N, H, W, C, i, j)
    y = jnp.transpose(y, (0, 3, 1, 4, 2, 5))    # (N, C, H, i, W, j)
    return y.reshape(N, Cin, H * r, W * r)


def _reference(x_nchw, weight_oihw, bias, up_scale):
    """Pure-JAX reference for correctness checking."""
    y = jax.lax.conv_general_dilated(
        x_nchw, weight_oihw, window_strides=(1, 1), padding=((1, 1), (1, 1)),
        dimension_numbers=("NCHW", "OIHW", "NCHW"))
    y = y + bias.reshape(1, -1, 1, 1)
    N, C, H, W = y.shape
    r = up_scale
    Cin = C // (r * r)
    y = y.reshape(N, Cin, r, r, H, W)
    y = jnp.transpose(y, (0, 1, 4, 2, 5, 3)).reshape(N, Cin, H * r, W * r)
    return y * jnp.tanh(jax.nn.softplus(y))


if __name__ == "__main__":
    key = jax.random.PRNGKey(0)
    k_x, k_w, k_b = jax.random.split(key, 3)

    batch, in_channels, H, W = 2, 4, 16, 16
    up_scale = 2
    out_channels = in_channels * up_scale ** 2

    x = jax.random.normal(k_x, (batch, in_channels, H, W), dtype=jnp.float32)
    weight = 0.1 * jax.random.normal(
        k_w, (out_channels, in_channels, 3, 3), dtype=jnp.float32)
    bias = 0.05 * jax.random.normal(k_b, (out_channels,), dtype=jnp.float32)

    out = upsample_block(x, weight, bias, up_scale)
    out = jax.block_until_ready(out)

    ref = _reference(x, weight, bias, up_scale)
    assert out.shape == (batch, in_channels, H * up_scale, W * up_scale), out.shape
    # 1e-3 tolerance covers the approximate-reciprocal mish path and MXU
    # accumulation-order differences vs. lax.conv.
    assert jnp.allclose(out, ref, atol=1e-3, rtol=1e-3), \
        float(jnp.max(jnp.abs(out - ref)))

    print("KERNEL_OK")
</pallas_src>

<mosaic_0001>
module attributes {stable_mosaic.version = 11 : i64} {
  func.func @_conv_mish_kernel(%arg0: i32, %arg1: i32, %arg2: memref<1x8x18x4xf32, #tpu.memory_space<vmem>>, %arg3: memref<1x8x18x4xf32, #tpu.memory_space<vmem>>, %arg4: memref<36x16xf32, #tpu.memory_space<vmem>>, %arg5: memref<1x16xf32, #tpu.memory_space<vmem>>, %arg6: memref<1x8x16x16xf32, #tpu.memory_space<vmem>>) attributes {dimension_semantics = [#tpu.dimension_semantics<parallel>, #tpu.dimension_semantics<parallel>], iteration_bounds = array<i64: 2, 2>, scalar_prefetch = 0 : i64, scratch_operands = 0 : i64, tpu.core_type = #tpu.core_type<tc>, window_params = [{transform_indices = @transform_0, window_bounds = array<i64: 1, 8, 18, 4>}, {transform_indices = @transform_1, window_bounds = array<i64: 1, 8, 18, 4>}, {pipeline_mode = #tpu.pipeline_mode<synchronous>, transform_indices = @transform_2, window_bounds = array<i64: 36, 16>}, {pipeline_mode = #tpu.pipeline_mode<synchronous>, transform_indices = @transform_3, window_bounds = array<i64: 1, 16>}, {transform_indices = @transform_4, window_bounds = array<i64: 1, 8, 16, 16>}]} {
    %c0 = arith.constant 0 : index
    %c0_0 = arith.constant 0 : index
    %c0_1 = arith.constant 0 : index
    %c0_2 = arith.constant 0 : index
    %0 = vector.load %arg2[%c0, %c0_0, %c0_1, %c0_2] : memref<1x8x18x4xf32, #tpu.memory_space<vmem>>, vector<1x8x18x4xf32>
    %1 = vector.shape_cast %0 : vector<1x8x18x4xf32> to vector<8x18x4xf32>
    %c0_3 = arith.constant 0 : index
    %c0_4 = arith.constant 0 : index
    %c0_5 = arith.constant 0 : index
    %c0_6 = arith.constant 0 : index
    %2 = vector.load %arg3[%c0_3, %c0_4, %c0_5, %c0_6] : memref<1x8x18x4xf32, #tpu.memory_space<vmem>>, vector<1x2x18x4xf32>
    %3 = vector.shape_cast %2 : vector<1x2x18x4xf32> to vector<2x18x4xf32>
    %4 = tpu.concatenate %1, %3 in 0 : vector<8x18x4xf32>, vector<2x18x4xf32> -> vector<10x18x4xf32>
    %5 = vector.extract_strided_slice %4 {offsets = [0, 0, 0], sizes = [8, 16, 4], strides = [1, 1, 1]} : vector<10x18x4xf32> to vector<8x16x4xf32>
    %6 = vector.extract_strided_slice %4 {offsets = [0, 1, 0], sizes = [8, 16, 4], strides = [1, 1, 1]} : vector<10x18x4xf32> to vector<8x16x4xf32>
    %7 = vector.extract_strided_slice %4 {offsets = [0, 2, 0], sizes = [8, 16, 4], strides = [1, 1, 1]} : vector<10x18x4xf32> to vector<8x16x4xf32>
    %8 = vector.extract_strided_slice %4 {offsets = [1, 0, 0], sizes = [8, 16, 4], strides = [1, 1, 1]} : vector<10x18x4xf32> to vector<8x16x4xf32>
    %9 = vector.extract_strided_slice %4 {offsets = [1, 1, 0], sizes = [8, 16, 4], strides = [1, 1, 1]} : vector<10x18x4xf32> to vector<8x16x4xf32>
    %10 = vector.extract_strided_slice %4 {offsets = [1, 2, 0], sizes = [8, 16, 4], strides = [1, 1, 1]} : vector<10x18x4xf32> to vector<8x16x4xf32>
    %11 = vector.extract_strided_slice %4 {offsets = [2, 0, 0], sizes = [8, 16, 4], strides = [1, 1, 1]} : vector<10x18x4xf32> to vector<8x16x4xf32>
    %12 = vector.extract_strided_slice %4 {offsets = [2, 1, 0], sizes = [8, 16, 4], strides = [1, 1, 1]} : vector<10x18x4xf32> to vector<8x16x4xf32>
    %13 = vector.extract_strided_slice %4 {offsets = [2, 2, 0], sizes = [8, 16, 4], strides = [1, 1, 1]} : vector<10x18x4xf32> to vector<8x16x4xf32>
    %14 = tpu.concatenate %5, %6, %7, %8, %9, %10, %11, %12, %13 in 2 : vector<8x16x4xf32>, vector<8x16x4xf32>, vector<8x16x4xf32>, vector<8x16x4xf32>, vector<8x16x4xf32>, vector<8x16x4xf32>, vector<8x16x4xf32>, vector<8x16x4xf32>, vector<8x16x4xf32> -> vector<8x16x36xf32>
    %15 = vector.shape_cast %14 : vector<8x16x36xf32> to vector<128x36xf32>
    %c0_7 = arith.constant 0 : index
    %c0_8 = arith.constant 0 : index
    %16 = vector.load %arg4[%c0_7, %c0_8] : memref<36x16xf32, #tpu.memory_space<vmem>>, vector<36x16xf32>
    %cst = arith.constant dense<0.000000e+00> : vector<128x16xf32>
    %17 = tpu.matmul %15, %16, %cst {dimension_numbers = #tpu.dot_dimension_numbers<[1], [0], [0], [1], [0, 0, 1, 1], [], []>} : vector<128x36xf32>, vector<36x16xf32>, vector<128x16xf32> -> vector<128x16xf32>
    %c0_9 = arith.constant 0 : index
    %c0_10 = arith.constant 0 : index
    %18 = vector.load %arg5[%c0_9, %c0_10] : memref<1x16xf32, #tpu.memory_space<vmem>>, vector<1x16xf32>
    %19 = vector.shape_cast %18 : vector<1x16xf32> to vector<16xf32>
    %20 = vector.shape_cast %19 : vector<16xf32> to vector<1x16xf32>
    %21 = vector.broadcast %20 : vector<1x16xf32> to vector<128x16xf32>
    %22 = arith.addf %17, %21 : vector<128x16xf32>
    %cst_11 = arith.constant 2.000000e+01 : f32
    %23 = vector.broadcast %cst_11 : f32 to vector<128x16xf32>
    %24 = arith.minimumf %22, %23 : vector<128x16xf32>
    %25 = math.exp %24 : vector<128x16xf32>
    %cst_12 = arith.constant 2.000000e+00 : f32
    %26 = vector.broadcast %cst_12 : f32 to vector<128x16xf32>
    %27 = arith.addf %25, %26 : vector<128x16xf32>
    %28 = arith.mulf %25, %27 : vector<128x16xf32>
    %cst_13 = arith.constant 2.000000e+00 : f32
    %29 = vector.broadcast %cst_13 : f32 to vector<128x16xf32>
    %30 = arith.addf %28, %29 : vector<128x16xf32>
    %31 = tpu.reciprocal %30 {approx = true} : vector<128x16xf32> -> vector<128x16xf32>
    %32 = arith.mulf %30, %31 : vector<128x16xf32>
    %cst_14 = arith.constant 2.000000e+00 : f32
    %33 = vector.broadcast %cst_14 : f32 to vector<128x16xf32>
    %34 = arith.subf %33, %32 : vector<128x16xf32>
    %35 = arith.mulf %31, %34 : vector<128x16xf32>
    %36 = arith.mulf %22, %28 : vector<128x16xf32>
    %37 = arith.mulf %36, %35 : vector<128x16xf32>
    %38 = vector.shape_cast %37 : vector<128x16xf32> to vector<8x16x16xf32>
    %c0_15 = arith.constant 0 : index
    %c0_16 = arith.constant 0 : index
    %c0_17 = arith.constant 0 : index
    %c0_18 = arith.constant 0 : index
    %39 = vector.load %arg6[%c0_15, %c0_16, %c0_17, %c0_18] : memref<1x8x16x16xf32, #tpu.memory_space<vmem>>, vector<1x8x16x16xf32>
    %40 = vector.shape_cast %39 : vector<1x8x16x16xf32> to vector<8x16x16xf32>
    %41 = vector.shape_cast %38 : vector<8x16x16xf32> to vector<1x8x16x16xf32>
    tpu.vector_store %arg6[%c0_15, %c0_16, %c0_17, %c0_18], %41 {strides = array<i32>} : memref<1x8x16x16xf32, #tpu.memory_space<vmem>>, vector<1x8x16x16xf32>,
    return
  }
  func.func @transform_0(%arg0: i32, %arg1: i32) -> (i32, i32, i32, i32) {
    %c0_i32 = arith.constant 0 : i32
    %c0_i32_0 = arith.constant 0 : i32
    %c0_i32_1 = arith.constant 0 : i32
    return %arg0, %arg1, %c0_i32, %c0_i32_0 : i32, i32, i32, i32
  }
  func.func @transform_1(%arg0: i32, %arg1: i32) -> (i32, i32, i32, i32) {
    %c1_i32 = arith.constant 1 : i32
    %0 = arith.addi %arg1, %c1_i32 : i32
    %c1_i32_0 = arith.constant 1 : i32
    %1 = arith.muli %0, %c1_i32_0 : i32
    %c0_i32 = arith.constant 0 : i32
    %c0_i32_1 = arith.constant 0 : i32
    %c0_i32_2 = arith.constant 0 : i32
    return %arg0, %1, %c0_i32, %c0_i32_1 : i32, i32, i32, i32
  }
  func.func @transform_2(%arg0: i32, %arg1: i32) -> (i32, i32) {
    %c0_i32 = arith.constant 0 : i32
    %c0_i32_0 = arith.constant 0 : i32
    %c0_i32_1 = arith.constant 0 : i32
    return %c0_i32, %c0_i32_0 : i32, i32
  }
  func.func @transform_3(%arg0: i32, %arg1: i32) -> (i32, i32) {
    %c0_i32 = arith.constant 0 : i32
    %c0_i32_0 = arith.constant 0 : i32
    %c0_i32_1 = arith.constant 0 : i32
    return %c0_i32, %c0_i32_0 : i32, i32
  }
  func.func @transform_4(%arg0: i32, %arg1: i32) -> (i32, i32, i32, i32) {
    %c0_i32 = arith.constant 0 : i32
    %c0_i32_0 = arith.constant 0 : i32
    %c0_i32_1 = arith.constant 0 : i32
    return %arg0, %arg1, %c0_i32, %c0_i32_0 : i32, i32, i32, i32
  }
}

</mosaic_0001>

<llo_original>
// kernel: tpu_custom_call.1
$region0: #{tpu_custom_call.1}
  #allocation0 [shape = 'u32[]', space=smem, size = 0x4, offset = 0x4, fixed_abs, tag = 'smem constant byte address 0x4 - core index']
  #allocation1 [shape = 'u32[144,128]{1,0:T(1,128)}', space=vmem, size = 0x12000, scoped, tag = 'internal scratch']
  %s0 = inlined_call_operand.vmem [shape: f32[2,24,18,4], index: 0, kind: input, shape index: {}]
  %s1 = inlined_call_operand.vmem [shape: f32[2,24,18,4], index: 1, kind: input, shape index: {}]
  %s2 = inlined_call_operand.vmem [shape: f32[36,16], index: 2, kind: input, shape index: {}]
  %s3 = inlined_call_operand.vmem [shape: f32[1,16], index: 3, kind: input, shape index: {}]
  %s4 = inlined_call_operand.hbm [shape: f32[2,16,16,16], index: 4, kind: output, shape index: {}]
  %s5 = sld [smem:[#allocation0]]
  $region49: #{tpu_custom_call.1} parent=0
    _
  %s7 = ssub.s32 1, %s5
  %s8 = scalar_select 0, %s7, %s5
  $region1: #{tpu_custom_call.1} parent=0
    #allocation2 [shape = 'u8[131072]{0}', space=vmem, size = 0x20000, scoped, tag = 'output window, operand 0']
    #allocation3 [shape = 's32[2]{0}', space=sflag, size = 0x8, scoped, tag = 'scoped memory for tpu_custom_call.1']
    %9 = vsyncpa [#allocation3], 0
    %s10 = scalar_lea.sflag [#allocation3], 1
    %11 = vsyncpa %s10, 0
    loop: start=0, step=1, limit=6
    $region2: #{tpu_custom_call.1} parent=1 // loop_pre_header
      _
    $region3: #{tpu_custom_call.1} parent=1 // loop_header
      %s13 = sphi 0, %s17
      %p14 = scmp.ge.s32.totalorder %s13, 6
      %s20 = sphi 0, %s32
      %s21 = sphi 0, %s28
      %s22 = sphi 0, %s20
      %s23 = sphi 0, %s21
      %s24 = sphi 0, %s22
      %s25 = sphi 0, %s23
      %s37 = sphi 0, %s39
      %s40 = sphi 0, %s37
      %s41 = sphi 0, %s40
      %s57 = sphi 0, %s41
      %s67 = sphi 0, %s69
      %s70 = sphi 0, %s67
      %s71 = sphi 0, %s70
      %s87 = sphi 0, %s71
      %s91 = sphi 0, %s91
      %s93 = sphi 0, %s91
      %s94 = sphi 0, %s93
      %s108 = sphi 0, %s94
      %s112 = sphi 0, %s112
      %s114 = sphi 0, %s112
      %s115 = sphi 0, %s114
      %s129 = sphi 0, %s115
      %s137 = sphi 0, %s139
      %s140 = sphi 0, %s137
      %s141 = sphi 0, %s140
      %s157 = sphi 0, %s141
    $region4: #{tpu_custom_call.1} parent=1 // loop_header_branch
      %16 = sbr.rel (%p14) target = $region8
    $region5: #{tpu_custom_call.1} parent=1 // loop_body
      %s18 = ssub.s32 %s13, 1
      %s19 = ssub.s32 %s13, 2
      %s26 = sadd.s32 1, %s21
      %p27 = scmp.ge.s32.totalorder %s26, 2
      %s28 = scalar_select %p27, 0, %s26
      %s29 = sadd.s32 1, %s20
      %s30 = scalar_select %p27, %s29, %s20
      %p31 = scmp.ge.s32.totalorder %s30, 2
      %s32 = scalar_select %p31, 0, %s30
      %s33 = ssub.s32 %s20, %s32
      %s34 = ssub.s32 %s21, %s28
      %s35 = sor.u32 %s33, %s34
      %p36 = scmp.eq.s32.totalorder %s35, 0
      %s38 = sadd.s32 %s37, 1
      %s39 = scalar_select %p36, %s37, %s38
      %p42 = pneg %p36
      %p43 = scmp.eq.s32.totalorder %s13, 3
      %p44 = por %p42, %p43
      %p45 = scmp.ne.s32.totalorder %s37, %s40
      %p46 = scmp.eq.s32.totalorder %s13, 0
      %p47 = por %p45, %p46
      %p48 = scmp.ne.s32.totalorder %s37, %s40
      %p49 = scmp.eq.s32.totalorder %s18, 3
      %p50 = por %p48, %p49
      %p51 = scmp.ne.s32.totalorder %s40, %s41
      %p52 = scmp.eq.s32.totalorder %s18, 0
      %p53 = por %p51, %p52
      %p54 = scmp.ne.s32.totalorder %s40, %s41
      %p55 = scmp.eq.s32.totalorder %s19, 3
      %p56 = por %p54, %p55
      %p58 = scmp.ne.s32.totalorder %s41, %s57
      %p59 = scmp.eq.s32.totalorder %s19, 0
      %p60 = por %p58, %p59
      %s61 = sadd.s32 %s21, 1
      %s62 = sadd.s32 %s28, 1
      %s63 = ssub.s32 %s20, %s32
      %s64 = ssub.s32 %s61, %s62
      %s65 = sor.u32 %s63, %s64
      %p66 = scmp.eq.s32.totalorder %s65, 0
      %s68 = sadd.s32 %s67, 1
      %s69 = scalar_select %p66, %s67, %s68
      %p72 = pneg %p66
      %p73 = scmp.eq.s32.totalorder %s13, 3
      %p74 = por %p72, %p73
      %p75 = scmp.ne.s32.totalorder %s67, %s70
      %p76 = scmp.eq.s32.totalorder %s13, 0
      %p77 = por %p75, %p76
      %p78 = scmp.ne.s32.totalorder %s67, %s70
      %p79 = scmp.eq.s32.totalorder %s18, 3
      %p80 = por %p78, %p79
      %p81 = scmp.ne.s32.totalorder %s70, %s71
      %p82 = scmp.eq.s32.totalorder %s18, 0
      %p83 = por %p81, %p82
      %p84 = scmp.ne.s32.totalorder %s70, %s71
      %p85 = scmp.eq.s32.totalorder %s19, 3
      %p86 = por %p84, %p85
      %p88 = scmp.ne.s32.totalorder %s71, %s87
      %p89 = scmp.eq.s32.totalorder %s19, 0
      %p90 = por %p88, %p89
      %s92 = sadd.s32 %s91, 1
      %p95 = scmp.eq.s32.totalorder %s13, 3
      %p96 = scmp.ne.s32.totalorder %s91, %s93
      %p97 = scmp.eq.s32.totalorder %s13, 0
      %p98 = por %p96, %p97
      %p99 = scmp.ne.s32.totalorder %s91, %s93
      %p100 = scmp.eq.s32.totalorder %s18, 3
      %p101 = por %p99, %p100
      %p102 = scmp.ne.s32.totalorder %s93, %s94
      %p103 = scmp.eq.s32.totalorder %s18, 0
      %p104 = por %p102, %p103
      %p105 = scmp.ne.s32.totalorder %s93, %s94
      %p106 = scmp.eq.s32.totalorder %s19, 3
      %p107 = por %p105, %p106
      %p109 = scmp.ne.s32.totalorder %s94, %s108
      %p110 = scmp.eq.s32.totalorder %s19, 0
      %p111 = por %p109, %p110
      %s113 = sadd.s32 %s112, 1
      %p116 = scmp.eq.s32.totalorder %s13, 3
      %p117 = scmp.ne.s32.totalorder %s112, %s114
      %p118 = scmp.eq.s32.totalorder %s13, 0
      %p119 = por %p117, %p118
      %p120 = scmp.ne.s32.totalorder %s112, %s114
      %p121 = scmp.eq.s32.totalorder %s18, 3
      %p122 = por %p120, %p121
      %p123 = scmp.ne.s32.totalorder %s114, %s115
      %p124 = scmp.eq.s32.totalorder %s18, 0
      %p125 = por %p123, %p124
      %p126 = scmp.ne.s32.totalorder %s114, %s115
      %p127 = scmp.eq.s32.totalorder %s19, 3
      %p128 = por %p126, %p127
      %p130 = scmp.ne.s32.totalorder %s115, %s129
      %p131 = scmp.eq.s32.totalorder %s19, 0
      %p132 = por %p130, %p131
      %s133 = ssub.s32 %s20, %s32
      %s134 = ssub.s32 %s21, %s28
      %s135 = sor.u32 %s133, %s134
      %p136 = scmp.eq.s32.totalorder %s135, 0
      %s138 = sadd.s32 %s137, 1
      %s139 = scalar_select %p136, %s137, %s138
      %p142 = pneg %p136
      %p143 = scmp.eq.s32.totalorder %s13, 3
      %p144 = por %p142, %p143
      %p145 = scmp.ne.s32.totalorder %s137, %s140
      %p146 = scmp.eq.s32.totalorder %s13, 0
      %p147 = por %p145, %p146
      %p148 = scmp.ne.s32.totalorder %s137, %s140
      %p149 = scmp.eq.s32.totalorder %s18, 3
      %p150 = por %p148, %p149
      %p151 = scmp.ne.s32.totalorder %s140, %s141
      %p152 = scmp.eq.s32.totalorder %s18, 0
      %p153 = por %p151, %p152
      %p154 = scmp.ne.s32.totalorder %s140, %s141
      %p155 = scmp.eq.s32.totalorder %s19, 3
      %p156 = por %p154, %p155
      %p158 = scmp.ne.s32.totalorder %s141, %s157
      %p159 = scmp.eq.s32.totalorder %s19, 0
      %p160 = por %p158, %p159
      %p161 = scmp.le.s32.totalorder 1, %s13
      %p162 = scmp.lt.s32.totalorder %s13, 5
      %p163 = pnand %p161, %p162
      %p164 = pneg %p163
      // Predicated region
      $region9: #{tpu_custom_call.1} parent=5 // pred_check
        _
      $region10: #{tpu_custom_call.1} parent=5 // pred_check_branch
        %166 = sbr.rel (%p163) target = $region12
      $region11: #{tpu_custom_call.1} parent=5 // pred_region
        %s167 = ssub.s32 %s13, 1
        // Predicated region
        $region13: #{tpu_custom_call.1} parent=11 // pred_check
          %p168 = pneg %p104
        $region14: #{tpu_custom_call.1} parent=11 // pred_check_branch
          %170 = sbr.rel (%p168) target = $region16
        $region15: #{tpu_custom_call.1} parent=11 // pred_region
          _
        $region16: #{tpu_custom_call.1} parent=11 // pred_fallthru
          _
        // Predicated region
        $region17: #{tpu_custom_call.1} parent=11 // pred_check
          %p171 = pneg %p125
        $region18: #{tpu_custom_call.1} parent=11 // pred_check_branch
          %173 = sbr.rel (%p171) target = $region20
        $region19: #{tpu_custom_call.1} parent=11 // pred_region
          _
        $region20: #{tpu_custom_call.1} parent=11 // pred_fallthru
          _
      $region12: #{tpu_custom_call.1} parent=5 // pred_fallthru
        _
      %p174 = scmp.lt.s32.totalorder %s13, 4
      // Predicated region
      $region21: #{tpu_custom_call.1} parent=5 // pred_check
        %p175 = pneg %p174
      $region22: #{tpu_custom_call.1} parent=5 // pred_check_branch
        %177 = sbr.rel (%p175) target = $region24
      $region23: #{tpu_custom_call.1} parent=5 // pred_region
        // Predicated region
        $region25: #{tpu_custom_call.1} parent=23 // pred_check
          %p178 = pneg %p47
        $region26: #{tpu_custom_call.1} parent=23 // pred_check_branch
          %180 = sbr.rel (%p178) target = $region28
        $region27: #{tpu_custom_call.1} parent=23 // pred_region
          %s181 = smul.u32 8, %s21
          %p182 = scmp.lt.s32.totalorder %s20, 1
          %s183 = scalar_select %p182, %s20, 1
          %p184 = scmp.lt.s32.totalorder %s181, 23
          %s185 = scalar_select %p184, %s181, 23
          %s186 = smul.addr %s185, 3
          %s187 = smul.addr %s183, 72
          %s188 = sadd.s32 %s186, %s187
          %s189 = smul.addr %s188, 8
          %s190 = scalar_lea.vmem %s0, %s189
          %s191 = smul.u32 8, %s21
        $region28: #{tpu_custom_call.1} parent=23 // pred_fallthru
          _
        // Predicated region
        $region29: #{tpu_custom_call.1} parent=23 // pred_check
          %p192 = pneg %p77
        $region30: #{tpu_custom_call.1} parent=23 // pred_check_branch
          %194 = sbr.rel (%p192) target = $region32
        $region31: #{tpu_custom_call.1} parent=23 // pred_region
          %s195 = sadd.s32 %s21, 1
          %s196 = smul.u32 8, %s195
          %p197 = scmp.lt.s32.totalorder %s20, 1
          %s198 = scalar_select %p197, %s20, 1
          %p199 = scmp.lt.s32.totalorder %s196, 23
          %s200 = scalar_select %p199, %s196, 23
          %s201 = smul.addr %s200, 3
          %s202 = smul.addr %s198, 72
          %s203 = sadd.s32 %s201, %s202
          %s204 = smul.addr %s203, 8
          %s205 = scalar_lea.vmem %s1, %s204
          %s206 = sadd.s32 %s21, 1
          %s207 = smul.u32 8, %s206
        $region32: #{tpu_custom_call.1} parent=23 // pred_fallthru
          _
      $region24: #{tpu_custom_call.1} parent=5 // pred_fallthru
        _
      %p208 = scmp.le.s32.totalorder 1, %s13
      %p209 = scmp.lt.s32.totalorder %s13, 5
      %p210 = pnand %p208, %p209
      %p211 = pneg %p210
      // Predicated region
      $region33: #{tpu_custom_call.1} parent=5 // pred_check
        _
      $region34: #{tpu_custom_call.1} parent=5 // pred_check_branch
        %213 = sbr.rel (%p210) target = $region36
      $region35: #{tpu_custom_call.1} parent=5 // pred_region
        %s214 = ssub.s32 %s13, 1
        %s215 = smul.u32 8, %s23
        %p216 = scmp.lt.s32.totalorder %s22, 1
        %s217 = scalar_select %p216, %s22, 1
        %p218 = scmp.lt.s32.totalorder %s215, 23
        %s219 = scalar_select %p218, %s215, 23
        %s220 = smul.addr %s219, 3
        %s221 = smul.addr %s217, 72
        %s222 = sadd.s32 %s220, %s221
        %s223 = smul.addr %s222, 8
        %s224 = scalar_lea.vmem %s0, %s223
        %p225 = pneg %p53
        %p226 = pneg %p50
        %s227 = sadd.s32 %s23, 1
        %s228 = smul.u32 8, %s227
        %p229 = scmp.lt.s32.totalorder %s22, 1
        %s230 = scalar_select %p229, %s22, 1
        %p231 = scmp.lt.s32.totalorder %s228, 23
        %s232 = scalar_select %p231, %s228, 23
        %s233 = smul.addr %s232, 3
        %s234 = smul.addr %s230, 72
        %s235 = sadd.s32 %s233, %s234
        %s236 = smul.addr %s235, 8
        %s237 = scalar_lea.vmem %s1, %s236
        %p238 = pneg %p83
        %p239 = pneg %p80
        %p240 = pneg %p104
        %p241 = pneg %p101
        %p242 = pneg %p125
        %p243 = pneg %p122
        %p244 = pneg %p153
        %p245 = pneg %p150
        %s246 = sand.u32 %s140, 1
        %s247 = scalar_lea.sflag [#allocation3], %s246
        %s248 = sand.u32 %s140, 1
        %s249 = smul.addr %s248, 128
        %s250 = scalar_lea.vmem [#allocation2], %s249
        %s251 = smul.u32 8, %s23
        %p252 = scmp.lt.s32.totalorder %s22, 1
        %s253 = scalar_select %p252, %s22, 1
        %p254 = scmp.lt.s32.totalorder %s251, 23
        %s255 = scalar_select %p254, %s251, 23
        %s256 = smul.addr %s255, 3
        %s257 = smul.addr %s253, 72
        %s258 = sadd.s32 %s256, %s257
        %s259 = smul.addr %s258, 8
        %s260 = scalar_lea.vmem %s0, %s259
        %s261 = smul.u32 8, %s23
        %s262 = sadd.s32 %s23, 1
        %s263 = smul.u32 8, %s262
        %p264 = scmp.lt.s32.totalorder %s22, 1
        %s265 = scalar_select %p264, %s22, 1
        %p266 = scmp.lt.s32.totalorder %s263, 23
        %s267 = scalar_select %p266, %s263, 23
        %s268 = smul.addr %s267, 3
        %s269 = smul.addr %s265, 72
        %s270 = sadd.s32 %s268, %s269
        %s271 = smul.addr %s270, 8
        %s272 = scalar_lea.vmem %s1, %s271
        %s273 = sadd.s32 %s23, 1
        %s274 = smul.u32 8, %s273
        %s275 = smul.u32 8, %s23
        %v276 = vld [vmem:[%s260] sm:$0xff]
        %v277 = vld [vmem:[%s260 + $0x8] sm:$0xff]
        %v278 = vld [vmem:[%s260 + $0x10] sm:$0x3]
        %v279 = vld [vmem:[%s260 + $0x18] sm:$0xff]
        %v280 = vld [vmem:[%s260 + $0x20] sm:$0xff]
        %v281 = vld [vmem:[%s260 + $0x28] sm:$0x3]
        %v282 = vld [vmem:[%s260 + $0x30] sm:$0xff]
        %v283 = vld [vmem:[%s260 + $0x38] sm:$0xff]
        %v284 = vld [vmem:[%s260 + $0x40] sm:$0x3]
        %v285 = vld [vmem:[%s260 + $0x48] sm:$0xff]
        %v286 = vld [vmem:[%s260 + $0x50] sm:$0xff]
        %v287 = vld [vmem:[%s260 + $0x58] sm:$0x3]
        %v288 = vld [vmem:[%s260 + $0x60] sm:$0xff]
        %v289 = vld [vmem:[%s260 + $0x68] sm:$0xff]
        %v290 = vld [vmem:[%s260 + $0x70] sm:$0x3]
        %v291 = vld [vmem:[%s260 + $0x78] sm:$0xff]
        %v292 = vld [vmem:[%s260 + $0x80] sm:$0xff]
        %v293 = vld [vmem:[%s260 + $0x88] sm:$0x3]
        %v294 = vld [vmem:[%s260 + $0x90] sm:$0xff]
        %v295 = vld [vmem:[%s260 + $0x98] sm:$0xff]
        %v296 = vld [vmem:[%s260 + $0xa0] sm:$0x3]
        %v297 = vld [vmem:[%s260 + $0xa8] sm:$0xff]
        %v298 = vld [vmem:[%s260 + $0xb0] sm:$0xff]
        %v299 = vld [vmem:[%s260 + $0xb8] sm:$0x3]
        %v300 = vld [vmem:[%s272] sm:$0xff]
        %v301 = vld [vmem:[%s272 + $0x8] sm:$0xff]
        %v302 = vld [vmem:[%s272 + $0x10] sm:$0x3]
        %v303 = vld [vmem:[%s272 + $0x18] sm:$0xff]
        %v304 = vld [vmem:[%s272 + $0x20] sm:$0xff]
        %v305 = vld [vmem:[%s272 + $0x28] sm:$0x3]
        %vm330 = vcmask 1046528
        %v331 = vrot.slane %v276, 1
        %v332 = vrot.slane %v277, 1
        %v333 = vsel %vm330, %v331, %v332
        %v334 = vrot.slane %v278, 1
        %v335 = vsel %vm330, %v332, %v334
        %v336 = vrot.slane %v279, 1
        %v337 = vrot.slane %v280, 1
        %v338 = vsel %vm330, %v336, %v337
        %v339 = vrot.slane %v281, 1
        %v340 = vsel %vm330, %v337, %v339
        %v341 = vrot.slane %v282, 1
        %v342 = vrot.slane %v283, 1
        %v343 = vsel %vm330, %v341, %v342
        %v344 = vrot.slane %v284, 1
        %v345 = vsel %vm330, %v342, %v344
        %v346 = vrot.slane %v285, 1
        %v347 = vrot.slane %v286, 1
        %v348 = vsel %vm330, %v346, %v347
        %v349 = vrot.slane %v287, 1
        %v350 = vsel %vm330, %v347, %v349
        %v351 = vrot.slane %v288, 1
        %v352 = vrot.slane %v289, 1
        %v353 = vsel %vm330, %v351, %v352
        %v354 = vrot.slane %v290, 1
        %v355 = vsel %vm330, %v352, %v354
        %v356 = vrot.slane %v291, 1
        %v357 = vrot.slane %v292, 1
        %v358 = vsel %vm330, %v356, %v357
        %v359 = vrot.slane %v293, 1
        %v360 = vsel %vm330, %v357, %v359
        %v361 = vrot.slane %v294, 1
        %v362 = vrot.slane %v295, 1
        %v363 = vsel %vm330, %v361, %v362
        %v364 = vrot.slane %v296, 1
        %v365 = vsel %vm330, %v362, %v364
        %v366 = vrot.slane %v297, 1
        %v367 = vrot.slane %v298, 1
        %v368 = vsel %vm330, %v366, %v367
        %v369 = vrot.slane %v299, 1
        %v370 = vsel %vm330, %v367, %v369
        %371 = vrot.lane.b32.xlu0 %v333, 4
        %v372 = vpop.permute.xlu0 %371
        %373 = vrot.lane.b32.xlu0 %v335, 4
        %v374 = vpop.permute.xlu0 %373
        %375 = vrot.lane.b32.xlu0 %v338, 4
        %v376 = vpop.permute.xlu0 %375
        %377 = vrot.lane.b32.xlu0 %v340, 4
        %v378 = vpop.permute.xlu0 %377
        %379 = vrot.lane.b32.xlu0 %v343, 4
        %v380 = vpop.permute.xlu0 %379
        %381 = vrot.lane.b32.xlu0 %v345, 4
        %v382 = vpop.permute.xlu0 %381
        %383 = vrot.lane.b32.xlu0 %v348, 4
        %v384 = vpop.permute.xlu0 %383
        %385 = vrot.lane.b32.xlu0 %v350, 4
        %v386 = vpop.permute.xlu0 %385
        %387 = vrot.lane.b32.xlu0 %v353, 4
        %v388 = vpop.permute.xlu0 %387
        %389 = vrot.lane.b32.xlu0 %v355, 4
        %v390 = vpop.permute.xlu0 %389
        %391 = vrot.lane.b32.xlu0 %v358, 4
        %v392 = vpop.permute.xlu0 %391
        %393 = vrot.lane.b32.xlu0 %v360, 4
        %v394 = vpop.permute.xlu0 %393
        %395 = vrot.lane.b32.xlu0 %v363, 4
        %v396 = vpop.permute.xlu0 %395
        %397 = vrot.lane.b32.xlu0 %v365, 4
        %v398 = vpop.permute.xlu0 %397
        %399 = vrot.lane.b32.xlu0 %v368, 4
        %v400 = vpop.permute.xlu0 %399
        %401 = vrot.lane.b32.xlu0 %v370, 4
        %v402 = vpop.permute.xlu0 %401
        %vm419 = vcmask 1045504
        %v420 = vrot.slane %v276, 2
        %v421 = vrot.slane %v277, 2
        %v422 = vsel %vm419, %v420, %v421
        %v423 = vrot.slane %v278, 2
        %v424 = vsel %vm419, %v421, %v423
        %v425 = vrot.slane %v279, 2
        %v426 = vrot.slane %v280, 2
        %v427 = vsel %vm419, %v425, %v426
        %v428 = vrot.slane %v281, 2
        %v429 = vsel %vm419, %v426, %v428
        %v430 = vrot.slane %v282, 2
        %v431 = vrot.slane %v283, 2
        %v432 = vsel %vm419, %v430, %v431
        %v433 = vrot.slane %v284, 2
        %v434 = vsel %vm419, %v431, %v433
        %v435 = vrot.slane %v285, 2
        %v436 = vrot.slane %v286, 2
        %v437 = vsel %vm419, %v435, %v436
        %v438 = vrot.slane %v287, 2
        %v439 = vsel %vm419, %v436, %v438
        %v440 = vrot.slane %v288, 2
        %v441 = vrot.slane %v289, 2
        %v442 = vsel %vm419, %v440, %v441
        %v443 = vrot.slane %v290, 2
        %v444 = vsel %vm419, %v441, %v443
        %v445 = vrot.slane %v291, 2
        %v446 = vrot.slane %v292, 2
        %v447 = vsel %vm419, %v445, %v446
        %v448 = vrot.slane %v293, 2
        %v449 = vsel %vm419, %v446, %v448
        %v450 = vrot.slane %v294, 2
        %v451 = vrot.slane %v295, 2
        %v452 = vsel %vm419, %v450, %v451
        %v453 = vrot.slane %v296, 2
        %v454 = vsel %vm419, %v451, %v453
        %v455 = vrot.slane %v297, 2
        %v456 = vrot.slane %v298, 2
        %v457 = vsel %vm419, %v455, %v456
        %v458 = vrot.slane %v299, 2
        %v459 = vsel %vm419, %v456, %v458
        %460 = vrot.lane.b32.xlu0 %v422, 8
        %v461 = vpop.permute.xlu0 %460
        %462 = vrot.lane.b32.xlu0 %v424, 8
        %v463 = vpop.permute.xlu0 %462
        %464 = vrot.lane.b32.xlu0 %v427, 8
        %v465 = vpop.permute.xlu0 %464
        %466 = vrot.lane.b32.xlu0 %v429, 8
        %v467 = vpop.permute.xlu0 %466
        %468 = vrot.lane.b32.xlu0 %v432, 8
        %v469 = vpop.permute.xlu0 %468
        %470 = vrot.lane.b32.xlu0 %v434, 8
        %v471 = vpop.permute.xlu0 %470
        %472 = vrot.lane.b32.xlu0 %v437, 8
        %v473 = vpop.permute.xlu0 %472
        %474 = vrot.lane.b32.xlu0 %v439, 8
        %v475 = vpop.permute.xlu0 %474
        %476 = vrot.lane.b32.xlu0 %v442, 8
        %v477 = vpop.permute.xlu0 %476
        %478 = vrot.lane.b32.xlu0 %v444, 8
        %v479 = vpop.permute.xlu0 %478
        %480 = vrot.lane.b32.xlu0 %v447, 8
        %v481 = vpop.permute.xlu0 %480
        %482 = vrot.lane.b32.xlu0 %v449, 8
        %v483 = vpop.permute.xlu0 %482
        %484 = vrot.lane.b32.xlu0 %v452, 8
        %v485 = vpop.permute.xlu0 %484
        %486 = vrot.lane.b32.xlu0 %v454, 8
        %v487 = vpop.permute.xlu0 %486
        %488 = vrot.lane.b32.xlu0 %v457, 8
        %v489 = vpop.permute.xlu0 %488
        %490 = vrot.lane.b32.xlu0 %v459, 8
        %v491 = vpop.permute.xlu0 %490
        %510 = vrot.lane.b32.xlu0 %v279, 12
        %v511 = vpop.permute.xlu0 %510
        %512 = vrot.lane.b32.xlu0 %v280, 12
        %v513 = vpop.permute.xlu0 %512
        %514 = vrot.lane.b32.xlu0 %v282, 12
        %v515 = vpop.permute.xlu0 %514
        %516 = vrot.lane.b32.xlu0 %v283, 12
        %v517 = vpop.permute.xlu0 %516
        %518 = vrot.lane.b32.xlu0 %v285, 12
        %v519 = vpop.permute.xlu0 %518
        %520 = vrot.lane.b32.xlu0 %v286, 12
        %v521 = vpop.permute.xlu0 %520
        %522 = vrot.lane.b32.xlu0 %v288, 12
        %v523 = vpop.permute.xlu0 %522
        %524 = vrot.lane.b32.xlu0 %v289, 12
        %v525 = vpop.permute.xlu0 %524
        %526 = vrot.lane.b32.xlu0 %v291, 12
        %v527 = vpop.permute.xlu0 %526
        %528 = vrot.lane.b32.xlu0 %v292, 12
        %v529 = vpop.permute.xlu0 %528
        %530 = vrot.lane.b32.xlu0 %v294, 12
        %v531 = vpop.permute.xlu0 %530
        %532 = vrot.lane.b32.xlu0 %v295, 12
        %v533 = vpop.permute.xlu0 %532
        %534 = vrot.lane.b32.xlu0 %v297, 12
        %v535 = vpop.permute.xlu0 %534
        %536 = vrot.lane.b32.xlu0 %v298, 12
        %v537 = vpop.permute.xlu0 %536
        %538 = vrot.lane.b32.xlu0 %v300, 12
        %v539 = vpop.permute.xlu0 %538
        %540 = vrot.lane.b32.xlu0 %v301, 12
        %v541 = vpop.permute.xlu0 %540
        %v559 = vrot.slane %v300, 1
        %v560 = vrot.slane %v301, 1
        %v561 = vsel %vm330, %v559, %v560
        %v562 = vrot.slane %v302, 1
        %v563 = vsel %vm330, %v560, %v562
        %564 = vrot.lane.b32.xlu0 %v338, 16
        %v565 = vpop.permute.xlu0 %564
        %566 = vrot.lane.b32.xlu0 %v340, 16
        %v567 = vpop.permute.xlu0 %566
        %568 = vrot.lane.b32.xlu0 %v343, 16
        %v569 = vpop.permute.xlu0 %568
        %570 = vrot.lane.b32.xlu0 %v345, 16
        %v571 = vpop.permute.xlu0 %570
        %572 = vrot.lane.b32.xlu0 %v348, 16
        %v573 = vpop.permute.xlu0 %572
        %574 = vrot.lane.b32.xlu0 %v350, 16
        %v575 = vpop.permute.xlu0 %574
        %576 = vrot.lane.b32.xlu0 %v353, 16
        %v577 = vpop.permute.xlu0 %576
        %578 = vrot.lane.b32.xlu0 %v355, 16
        %v579 = vpop.permute.xlu0 %578
        %580 = vrot.lane.b32.xlu0 %v358, 16
        %v581 = vpop.permute.xlu0 %580
        %582 = vrot.lane.b32.xlu0 %v360, 16
        %v583 = vpop.permute.xlu0 %582
        %584 = vrot.lane.b32.xlu0 %v363, 16
        %v585 = vpop.permute.xlu0 %584
        %586 = vrot.lane.b32.xlu0 %v365, 16
        %v587 = vpop.permute.xlu0 %586
        %588 = vrot.lane.b32.xlu0 %v368, 16
        %v589 = vpop.permute.xlu0 %588
        %590 = vrot.lane.b32.xlu0 %v370, 16
        %v591 = vpop.permute.xlu0 %590
        %592 = vrot.lane.b32.xlu0 %v561, 16
        %v593 = vpop.permute.xlu0 %592
        %594 = vrot.lane.b32.xlu0 %v563, 16
        %v595 = vpop.permute.xlu0 %594
        %v612 = vrot.slane %v300, 2
        %v613 = vrot.slane %v301, 2
        %v614 = vsel %vm419, %v612, %v613
        %v615 = vrot.slane %v302, 2
        %v616 = vsel %vm419, %v613, %v615
        %617 = vrot.lane.b32.xlu0 %v427, 20
        %v618 = vpop.permute.xlu0 %617
        %619 = vrot.lane.b32.xlu0 %v429, 20
        %v620 = vpop.permute.xlu0 %619
        %621 = vrot.lane.b32.xlu0 %v432, 20
        %v622 = vpop.permute.xlu0 %621
        %623 = vrot.lane.b32.xlu0 %v434, 20
        %v624 = vpop.permute.xlu0 %623
        %625 = vrot.lane.b32.xlu0 %v437, 20
        %v626 = vpop.permute.xlu0 %625
        %627 = vrot.lane.b32.xlu0 %v439, 20
        %v628 = vpop.permute.xlu0 %627
        %629 = vrot.lane.b32.xlu0 %v442, 20
        %v630 = vpop.permute.xlu0 %629
        %631 = vrot.lane.b32.xlu0 %v444, 20
        %v632 = vpop.permute.xlu0 %631
        %633 = vrot.lane.b32.xlu0 %v447, 20
        %v634 = vpop.permute.xlu0 %633
        %635 = vrot.lane.b32.xlu0 %v449, 20
        %v636 = vpop.permute.xlu0 %635
        %637 = vrot.lane.b32.xlu0 %v452, 20
        %v638 = vpop.permute.xlu0 %637
        %639 = vrot.lane.b32.xlu0 %v454, 20
        %v640 = vpop.permute.xlu0 %639
        %641 = vrot.lane.b32.xlu0 %v457, 20
        %v642 = vpop.permute.xlu0 %641
        %643 = vrot.lane.b32.xlu0 %v459, 20
        %v644 = vpop.permute.xlu0 %643
        %645 = vrot.lane.b32.xlu0 %v614, 20
        %v646 = vpop.permute.xlu0 %645
        %647 = vrot.lane.b32.xlu0 %v616, 20
        %v648 = vpop.permute.xlu0 %647
        %667 = vrot.lane.b32.xlu0 %v282, 24
        %v668 = vpop.permute.xlu0 %667
        %669 = vrot.lane.b32.xlu0 %v283, 24
        %v670 = vpop.permute.xlu0 %669
        %671 = vrot.lane.b32.xlu0 %v285, 24
        %v672 = vpop.permute.xlu0 %671
        %673 = vrot.lane.b32.xlu0 %v286, 24
        %v674 = vpop.permute.xlu0 %673
        %675 = vrot.lane.b32.xlu0 %v288, 24
        %v676 = vpop.permute.xlu0 %675
        %677 = vrot.lane.b32.xlu0 %v289, 24
        %v678 = vpop.permute.xlu0 %677
        %679 = vrot.lane.b32.xlu0 %v291, 24
        %v680 = vpop.permute.xlu0 %679
        %681 = vrot.lane.b32.xlu0 %v292, 24
        %v682 = vpop.permute.xlu0 %681
        %683 = vrot.lane.b32.xlu0 %v294, 24
        %v684 = vpop.permute.xlu0 %683
        %685 = vrot.lane.b32.xlu0 %v295, 24
        %v686 = vpop.permute.xlu0 %685
        %687 = vrot.lane.b32.xlu0 %v297, 24
        %v688 = vpop.permute.xlu0 %687
        %689 = vrot.lane.b32.xlu0 %v298, 24
        %v690 = vpop.permute.xlu0 %689
        %691 = vrot.lane.b32.xlu0 %v300, 24
        %v692 = vpop.permute.xlu0 %691
        %693 = vrot.lane.b32.xlu0 %v301, 24
        %v694 = vpop.permute.xlu0 %693
        %695 = vrot.lane.b32.xlu0 %v303, 24
        %v696 = vpop.permute.xlu0 %695
        %697 = vrot.lane.b32.xlu0 %v304, 24
        %v698 = vpop.permute.xlu0 %697
        %v716 = vrot.slane %v303, 1
        %v717 = vrot.slane %v304, 1
        %v718 = vsel %vm330, %v716, %v717
        %v719 = vrot.slane %v305, 1
        %v720 = vsel %vm330, %v717, %v719
        %721 = vrot.lane.b32.xlu0 %v343, 28
        %v722 = vpop.permute.xlu0 %721
        %723 = vrot.lane.b32.xlu0 %v345, 28
        %v724 = vpop.permute.xlu0 %723
        %725 = vrot.lane.b32.xlu0 %v348, 28
        %v726 = vpop.permute.xlu0 %725
        %727 = vrot.lane.b32.xlu0 %v350, 28
        %v728 = vpop.permute.xlu0 %727
        %729 = vrot.lane.b32.xlu0 %v353, 28
        %v730 = vpop.permute.xlu0 %729
        %731 = vrot.lane.b32.xlu0 %v355, 28
        %v732 = vpop.permute.xlu0 %731
        %733 = vrot.lane.b32.xlu0 %v358, 28
        %v734 = vpop.permute.xlu0 %733
        %735 = vrot.lane.b32.xlu0 %v360, 28
        %v736 = vpop.permute.xlu0 %735
        %737 = vrot.lane.b32.xlu0 %v363, 28
        %v738 = vpop.permute.xlu0 %737
        %739 = vrot.lane.b32.xlu0 %v365, 28
        %v740 = vpop.permute.xlu0 %739
        %741 = vrot.lane.b32.xlu0 %v368, 28
        %v742 = vpop.permute.xlu0 %741
        %743 = vrot.lane.b32.xlu0 %v370, 28
        %v744 = vpop.permute.xlu0 %743
        %745 = vrot.lane.b32.xlu0 %v561, 28
        %v746 = vpop.permute.xlu0 %745
        %747 = vrot.lane.b32.xlu0 %v563, 28
        %v748 = vpop.permute.xlu0 %747
        %749 = vrot.lane.b32.xlu0 %v718, 28
        %v750 = vpop.permute.xlu0 %749
        %751 = vrot.lane.b32.xlu0 %v720, 28
        %v752 = vpop.permute.xlu0 %751
        %v769 = vrot.slane %v303, 2
        %v770 = vrot.slane %v304, 2
        %v771 = vsel %vm419, %v769, %v770
        %v772 = vrot.slane %v305, 2
        %v773 = vsel %vm419, %v770, %v772
        %774 = vrot.lane.b32.xlu0 %v432, 32
        %v775 = vpop.permute.xlu0 %774
        %776 = vrot.lane.b32.xlu0 %v434, 32
        %v777 = vpop.permute.xlu0 %776
        %778 = vrot.lane.b32.xlu0 %v437, 32
        %v779 = vpop.permute.xlu0 %778
        %780 = vrot.lane.b32.xlu0 %v439, 32
        %v781 = vpop.permute.xlu0 %780
        %782 = vrot.lane.b32.xlu0 %v442, 32
        %v783 = vpop.permute.xlu0 %782
        %784 = vrot.lane.b32.xlu0 %v444, 32
        %v785 = vpop.permute.xlu0 %784
        %786 = vrot.lane.b32.xlu0 %v447, 32
        %v787 = vpop.permute.xlu0 %786
        %788 = vrot.lane.b32.xlu0 %v449, 32
        %v789 = vpop.permute.xlu0 %788
        %790 = vrot.lane.b32.xlu0 %v452, 32
        %v791 = vpop.permute.xlu0 %790
        %792 = vrot.lane.b32.xlu0 %v454, 32
        %v793 = vpop.permute.xlu0 %792
        %794 = vrot.lane.b32.xlu0 %v457, 32
        %v795 = vpop.permute.xlu0 %794
        %796 = vrot.lane.b32.xlu0 %v459, 32
        %v797 = vpop.permute.xlu0 %796
        %798 = vrot.lane.b32.xlu0 %v614, 32
        %v799 = vpop.permute.xlu0 %798
        %800 = vrot.lane.b32.xlu0 %v616, 32
        %v801 = vpop.permute.xlu0 %800
        %802 = vrot.lane.b32.xlu0 %v771, 32
        %v803 = vpop.permute.xlu0 %802
        %804 = vrot.lane.b32.xlu0 %v773, 32
        %v805 = vpop.permute.xlu0 %804
        %vm822 = vcmask 31744
        %v823 = vsel %vm822, %v276, %v372
        %v824 = vsel %vm822, %v277, %v374
        %v825 = vsel %vm822, %v279, %v376
        %v826 = vsel %vm822, %v280, %v378
        %v827 = vsel %vm822, %v282, %v380
        %v828 = vsel %vm822, %v283, %v382
        %v829 = vsel %vm822, %v285, %v384
        %v830 = vsel %vm822, %v286, %v386
        %v831 = vsel %vm822, %v288, %v388
        %v832 = vsel %vm822, %v289, %v390
        %v833 = vsel %vm822, %v291, %v392
        %v834 = vsel %vm822, %v292, %v394
        %v835 = vsel %vm822, %v294, %v396
        %v836 = vsel %vm822, %v295, %v398
        %v837 = vsel %vm822, %v297, %v400
        %v838 = vsel %vm822, %v298, %v402
        %vm839 = vcmask 64512
        %v840 = vsel %vm839, %v823, %v461
        %v841 = vsel %vm839, %v824, %v463
        %v842 = vsel %vm839, %v825, %v465
        %v843 = vsel %vm839, %v826, %v467
        %v844 = vsel %vm839, %v827, %v469
        %v845 = vsel %vm839, %v828, %v471
        %v846 = vsel %vm839, %v829, %v473
        %v847 = vsel %vm839, %v830, %v475
        %v848 = vsel %vm839, %v831, %v477
        %v849 = vsel %vm839, %v832, %v479
        %v850 = vsel %vm839, %v833, %v481
        %v851 = vsel %vm839, %v834, %v483
        %v852 = vsel %vm839, %v835, %v485
        %v853 = vsel %vm839, %v836, %v487
        %v854 = vsel %vm839, %v837, %v489
        %v855 = vsel %vm839, %v838, %v491
        %vm856 = vcmask 97280
        %v857 = vsel %vm856, %v840, %v511
        %v858 = vsel %vm856, %v841, %v513
        %v859 = vsel %vm856, %v842, %v515
        %v860 = vsel %vm856, %v843, %v517
        %v861 = vsel %vm856, %v844, %v519
        %v862 = vsel %vm856, %v845, %v521
        %v863 = vsel %vm856, %v846, %v523
        %v864 = vsel %vm856, %v847, %v525
        %v865 = vsel %vm856, %v848, %v527
        %v866 = vsel %vm856, %v849, %v529
        %v867 = vsel %vm856, %v850, %v531
        %v868 = vsel %vm856, %v851, %v533
        %v869 = vsel %vm856, %v852, %v535
        %v870 = vsel %vm856, %v853, %v537
        %v871 = vsel %vm856, %v854, %v539
        %v872 = vsel %vm856, %v855, %v541
        %vm873 = vcmask 130048
        %v874 = vsel %vm873, %v857, %v565
        %v875 = vsel %vm873, %v858, %v567
        %v876 = vsel %vm873, %v859, %v569
        %v877 = vsel %vm873, %v860, %v571
        %v878 = vsel %vm873, %v861, %v573
        %v879 = vsel %vm873, %v862, %v575
        %v880 = vsel %vm873, %v863, %v577
        %v881 = vsel %vm873, %v864, %v579
        %v882 = vsel %vm873, %v865, %v581
        %v883 = vsel %vm873, %v866, %v583
        %v884 = vsel %vm873, %v867, %v585
        %v885 = vsel %vm873, %v868, %v587
        %v886 = vsel %vm873, %v869, %v589
        %v887 = vsel %vm873, %v870, %v591
        %v888 = vsel %vm873, %v871, %v593
        %v889 = vsel %vm873, %v872, %v595
        %vm890 = vcmask 162816
        %v891 = vsel %vm890, %v874, %v618
        %v892 = vsel %vm890, %v875, %v620
        %v893 = vsel %vm890, %v876, %v622
        %v894 = vsel %vm890, %v877, %v624
        %v895 = vsel %vm890, %v878, %v626
        %v896 = vsel %vm890, %v879, %v628
        %v897 = vsel %vm890, %v880, %v630
        %v898 = vsel %vm890, %v881, %v632
        %v899 = vsel %vm890, %v882, %v634
        %v900 = vsel %vm890, %v883, %v636
        %v901 = vsel %vm890, %v884, %v638
        %v902 = vsel %vm890, %v885, %v640
        %v903 = vsel %vm890, %v886, %v642
        %v904 = vsel %vm890, %v887, %v644
        %v905 = vsel %vm890, %v888, %v646
        %v906 = vsel %vm890, %v889, %v648
        %vm907 = vcmask 195584
        %v908 = vsel %vm907, %v891, %v668
        %v909 = vsel %vm907, %v892, %v670
        %v910 = vsel %vm907, %v893, %v672
        %v911 = vsel %vm907, %v894, %v674
        %v912 = vsel %vm907, %v895, %v676
        %v913 = vsel %vm907, %v896, %v678
        %v914 = vsel %vm907, %v897, %v680
        %v915 = vsel %vm907, %v898, %v682
        %v916 = vsel %vm907, %v899, %v684
        %v917 = vsel %vm907, %v900, %v686
        %v918 = vsel %vm907, %v901, %v688
        %v919 = vsel %vm907, %v902, %v690
        %v920 = vsel %vm907, %v903, %v692
        %v921 = vsel %vm907, %v904, %v694
        %v922 = vsel %vm907, %v905, %v696
        %v923 = vsel %vm907, %v906, %v698
        %vm924 = vcmask 228352
        %v925 = vsel %vm924, %v908, %v722
        %v926 = vsel %vm924, %v909, %v724
        %v927 = vsel %vm924, %v910, %v726
        %v928 = vsel %vm924, %v911, %v728
        %v929 = vsel %vm924, %v912, %v730
        %v930 = vsel %vm924, %v913, %v732
        %v931 = vsel %vm924, %v914, %v734
        %v932 = vsel %vm924, %v915, %v736
        %v933 = vsel %vm924, %v916, %v738
        %v934 = vsel %vm924, %v917, %v740
        %v935 = vsel %vm924, %v918, %v742
        %v936 = vsel %vm924, %v919, %v744
        %v937 = vsel %vm924, %v920, %v746
        %v938 = vsel %vm924, %v921, %v748
        %v939 = vsel %vm924, %v922, %v750
        %v940 = vsel %vm924, %v923, %v752
        %vm941 = vcmask 261120
        %v942 = vsel %vm941, %v925, %v775
        %v943 = vsel %vm941, %v926, %v777
        %v944 = vsel %vm941, %v927, %v779
        %v945 = vsel %vm941, %v928, %v781
        %v946 = vsel %vm941, %v929, %v783
        %v947 = vsel %vm941, %v930, %v785
        %v948 = vsel %vm941, %v931, %v787
        %v949 = vsel %vm941, %v932, %v789
        %v950 = vsel %vm941, %v933, %v791
        %v951 = vsel %vm941, %v934, %v793
        %v952 = vsel %vm941, %v935, %v795
        %v953 = vsel %vm941, %v936, %v797
        %v954 = vsel %vm941, %v937, %v799
        %v955 = vsel %vm941, %v938, %v801
        %v956 = vsel %vm941, %v939, %v803
        %v957 = vsel %vm941, %v940, %v805
        %v958 = vld [vmem:[%s2] sm:$0xff]
        %v959 = vld [vmem:[%s2 + $0x8] sm:$0xff]
        %v960 = vld [vmem:[%s2 + $0x10] sm:$0xff]
        %v961 = vld [vmem:[%s2 + $0x18] sm:$0xff]
        %v962 = vld [vmem:[%s2 + $0x20] sm:$0xf]
        %v963 = vld [vmem:[%s3] sm:$0x1]
        %v965 = vlaneseq
        %v966 = vshrl.u32 %v965, 7
        %v967 = vsub.s32 0, %v966
        %v968 = vrot.slane %v963, %v967
        %vm970 = vcmask 293888
        %v972 = vsel %vm970, %v942, 0
        %v975 = vsel %vm970, %v943, 0
        %v978 = vsel %vm970, %v944, 0
        %v981 = vsel %vm970, %v945, 0
        %v984 = vsel %vm970, %v946, 0
        %v987 = vsel %vm970, %v947, 0
        %v990 = vsel %vm970, %v948, 0
        %v993 = vsel %vm970, %v949, 0
        %v996 = vsel %vm970, %v950, 0
        %v999 = vsel %vm970, %v951, 0
        %v1002 = vsel %vm970, %v952, 0
        %v1005 = vsel %vm970, %v953, 0
        %v1008 = vsel %vm970, %v954, 0
        %v1011 = vsel %vm970, %v955, 0
        %v1014 = vsel %vm970, %v956, 0
        %v1017 = vsel %vm970, %v957, 0
        %vm1019 = vcmask 1043456
        %v1021 = vsel %vm1019, %v962, 0
        %1023 = vmatprep.subr.mxu0 0.0
        %1024 = vmatpush1.msra.mxu0 0.0
        %1025 = vmatprep.subr.mxu0 0.0
        %1026 = vmatpush1.msra.mxu0 0.0
        %1027 = vmatprep.subr.mxu0 0.0
        %1028 = vmatpush1.msra.mxu0 0.0
        %1029 = vmatprep.subr.mxu0 0.0
        %1030 = vmatpush1.msra.mxu0 0.0
        %1031 = vmatprep.subr.mxu0 0.0
        %1032 = vmatpush1.msra.mxu0 0.0
        %1033 = vmatprep.subr.mxu0 0.0
        %1034 = vmatpush1.msra.mxu0 0.0
        %1035 = vmatprep.subr.mxu0 0.0
        %1036 = vmatpush1.msra.mxu0 0.0
        %1037 = vmatprep.subr.mxu0 0.0
        %1038 = vmatpush1.msra.mxu0 0.0
        %1039 = vmatprep.subr.mxu0 0.0
        %1040 = vmatpush1.msra.mxu0 0.0
        %1041 = vmatprep.subr.mxu0 0.0
        %1042 = vmatpush1.msra.mxu0 0.0
        %1043 = vmatprep.subr.mxu0 0.0
        %1044 = vmatpush1.msra.mxu0 0.0
        %1045 = vmatprep.subr.mxu0 0.0
        %1046 = vmatpush1.msra.mxu0 %v1021
        %1047 = vmatprep.subr.mxu0 0.0
        %1048 = vmatpush1.msra.mxu0 %v961
        %1049 = vmatprep.subr.mxu0 0.0
        %1050 = vmatpush1.msra.mxu0 %v960
        %1051 = vmatprep.subr.mxu0 0.0
        %1052 = vmatpush1.msra.mxu0 %v959
        %1053 = vmatprep.subr.mxu0 0.0
        %1054 = vmatpush1.msra.mxu0 %v958
        %1055 = vmatprep.subr.mxu0 0.0
        %1056 = vmatpush2.msra.mxu0 0.0
        %1057 = vmatprep.subr.mxu0 0.0
        %1058 = vmatpush2.msra.mxu0 0.0
        %1059 = vmatprep.subr.mxu0 0.0
        %1060 = vmatpush2.msra.mxu0 0.0
        %1061 = vmatprep.subr.mxu0 0.0
        %1062 = vmatpush2.msra.mxu0 0.0
        %1063 = vmatprep.subr.mxu0 0.0
        %1064 = vmatpush2.msra.mxu0 0.0
        %1065 = vmatprep.subr.mxu0 0.0
        %1066 = vmatpush2.msra.mxu0 0.0
        %1067 = vmatprep.subr.mxu0 0.0
        %1068 = vmatpush2.msra.mxu0 0.0
        %1069 = vmatprep.subr.mxu0 0.0
        %1070 = vmatpush2.msra.mxu0 0.0
        %1071 = vmatprep.subr.mxu0 0.0
        %1072 = vmatpush2.msra.mxu0 0.0
        %1073 = vmatprep.subr.mxu0 0.0
        %1074 = vmatpush2.msra.mxu0 0.0
        %1075 = vmatprep.subr.mxu0 0.0
        %1076 = vmatpush2.msra.mxu0 0.0
        %1077 = vmatprep.subr.mxu0 0.0
        %1078 = vmatpush2.msra.mxu0 0.0
        %1079 = vmatprep.subr.mxu0 0.0
        %1080 = vmatpush2.msra.mxu0 0.0
        %1081 = vmatprep.subr.mxu0 0.0
        %1082 = vmatpush2.msra.mxu0 0.0
        %1083 = vmatprep.subr.mxu0 0.0
        %1084 = vmatpush2.msra.mxu0 0.0
        %1085 = vmatprep.subr.mxu0 0.0
        %1086 = vmatpush2.msra.mxu0 0.0
        %1087 = vmatprep.mubr.f32.mxu0 0.0
        %1088 = vmatmul.mubr.f32.gmra.mxu0 %v972
        %v1089 = vpop.f32.mrf.mxu0
        %v1090 = vadd.f32 %v968, %v1089
        %v1091 = vpop.f32.mrf.mxu0
        %1092 = vmatprep.mubr.f32.mxu0 0.0
        %1093 = vmatmul.mubr.f32.gmra.mxu0 %v975
        %v1094 = vpop.f32.mrf.mxu0
        %v1095 = vadd.f32 %v968, %v1094
        %v1096 = vpop.f32.mrf.mxu0
        %1097 = vmatprep.mubr.f32.mxu0 0.0
        %1098 = vmatmul.mubr.f32.gmra.mxu0 %v978
        %v1099 = vpop.f32.mrf.mxu0
        %v1100 = vadd.f32 %v968, %v1099
        %v1101 = vpop.f32.mrf.mxu0
        %1102 = vmatprep.mubr.f32.mxu0 0.0
        %1103 = vmatmul.mubr.f32.gmra.mxu0 %v981
        %v1104 = vpop.f32.mrf.mxu0
        %v1105 = vadd.f32 %v968, %v1104
        %v1106 = vpop.f32.mrf.mxu0
        %1107 = vmatprep.mubr.f32.mxu0 0.0
        %1108 = vmatmul.mubr.f32.gmra.mxu0 %v984
        %v1109 = vpop.f32.mrf.mxu0
        %v1110 = vadd.f32 %v968, %v1109
        %v1111 = vpop.f32.mrf.mxu0
        %1112 = vmatprep.mubr.f32.mxu0 0.0
        %1113 = vmatmul.mubr.f32.gmra.mxu0 %v987
        %v1114 = vpop.f32.mrf.mxu0
        %v1115 = vadd.f32 %v968, %v1114
        %v1116 = vpop.f32.mrf.mxu0
        %1117 = vmatprep.mubr.f32.mxu0 0.0
        %1118 = vmatmul.mubr.f32.gmra.mxu0 %v990
        %v1119 = vpop.f32.mrf.mxu0
        %v1120 = vadd.f32 %v968, %v1119
        %v1121 = vpop.f32.mrf.mxu0
        %1122 = vmatprep.mubr.f32.mxu0 0.0
        %1123 = vmatmul.mubr.f32.gmra.mxu0 %v993
        %v1124 = vpop.f32.mrf.mxu0
        %v1125 = vadd.f32 %v968, %v1124
        %v1126 = vpop.f32.mrf.mxu0
        %1127 = vmatprep.mubr.f32.mxu0 0.0
        %1128 = vmatmul.mubr.f32.gmra.mxu0 %v996
        %v1129 = vpop.f32.mrf.mxu0
        %v1130 = vadd.f32 %v968, %v1129
        %v1131 = vpop.f32.mrf.mxu0
        %1132 = vmatprep.mubr.f32.mxu0 0.0
        %1133 = vmatmul.mubr.f32.gmra.mxu0 %v999
        %v1134 = vpop.f32.mrf.mxu0
        %v1135 = vadd.f32 %v968, %v1134
        %v1136 = vpop.f32.mrf.mxu0
        %1137 = vmatprep.mubr.f32.mxu0 0.0
        %1138 = vmatmul.mubr.f32.gmra.mxu0 %v1002
        %v1139 = vpop.f32.mrf.mxu0
        %v1140 = vadd.f32 %v968, %v1139
        %v1141 = vpop.f32.mrf.mxu0
        %1142 = vmatprep.mubr.f32.mxu0 0.0
        %1143 = vmatmul.mubr.f32.gmra.mxu0 %v1005
        %v1144 = vpop.f32.mrf.mxu0
        %v1145 = vadd.f32 %v968, %v1144
        %v1146 = vpop.f32.mrf.mxu0
        %1147 = vmatprep.mubr.f32.mxu0 0.0
        %1148 = vmatmul.mubr.f32.gmra.mxu0 %v1008
        %v1149 = vpop.f32.mrf.mxu0
        %v1150 = vadd.f32 %v968, %v1149
        %v1151 = vpop.f32.mrf.mxu0
        %1152 = vmatprep.mubr.f32.mxu0 0.0
        %1153 = vmatmul.mubr.f32.gmra.mxu0 %v1011
        %v1154 = vpop.f32.mrf.mxu0
        %v1155 = vadd.f32 %v968, %v1154
        %v1156 = vpop.f32.mrf.mxu0
        %1157 = vmatprep.mubr.f32.mxu0 0.0
        %1158 = vmatmul.mubr.f32.gmra.mxu0 %v1014
        %v1159 = vpop.f32.mrf.mxu0
        %v1160 = vadd.f32 %v968, %v1159
        %v1161 = vpop.f32.mrf.mxu0
        %1162 = vmatprep.mubr.f32.mxu0 0.0
        %1163 = vmatmul.mubr.f32.gmra.mxu0 %v1017
        %v1164 = vpop.f32.mrf.mxu0
        %v1165 = vadd.f32 %v968, %v1164
        %v1166 = vpop.f32.mrf.mxu0
        %1167 = vdwg.mxu0
        %v1168 = vmin.f32 %v1090, 20.0
        %v1169 = vmin.f32 %v1095, 20.0
        %v1170 = vmin.f32 %v1100, 20.0
        %v1171 = vmin.f32 %v1105, 20.0
        %v1172 = vmin.f32 %v1110, 20.0
        %v1173 = vmin.f32 %v1115, 20.0
        %v1174 = vmin.f32 %v1120, 20.0
        %v1175 = vmin.f32 %v1125, 20.0
        %v1176 = vmin.f32 %v1130, 20.0
        %v1177 = vmin.f32 %v1135, 20.0
        %v1178 = vmin.f32 %v1140, 20.0
        %v1179 = vmin.f32 %v1145, 20.0
        %v1180 = vmin.f32 %v1150, 20.0
        %v1181 = vmin.f32 %v1155, 20.0
        %v1182 = vmin.f32 %v1160, 20.0
        %v1183 = vmin.f32 %v1165, 20.0
        %v1184 = vmul.f32 %v1168, 1.442695
        %v1185 = vpow.pop %v1184
        %v1186 = vmul.f32 %v1169, 1.442695
        %v1187 = vpow.pop %v1186
        %v1188 = vmul.f32 %v1170, 1.442695
        %v1189 = vpow.pop %v1188
        %v1190 = vmul.f32 %v1171, 1.442695
        %v1191 = vpow.pop %v1190
        %v1192 = vmul.f32 %v1172, 1.442695
        %v1193 = vpow.pop %v1192
        %v1194 = vmul.f32 %v1173, 1.442695
        %v1195 = vpow.pop %v1194
        %v1196 = vmul.f32 %v1174, 1.442695
        %v1197 = vpow.pop %v1196
        %v1198 = vmul.f32 %v1175, 1.442695
        %v1199 = vpow.pop %v1198
        %v1200 = vmul.f32 %v1176, 1.442695
        %v1201 = vpow.pop %v1200
        %v1202 = vmul.f32 %v1177, 1.442695
        %v1203 = vpow.pop %v1202
        %v1204 = vmul.f32 %v1178, 1.442695
        %v1205 = vpow.pop %v1204
        %v1206 = vmul.f32 %v1179, 1.442695
        %v1207 = vpow.pop %v1206
        %v1208 = vmul.f32 %v1180, 1.442695
        %v1209 = vpow.pop %v1208
        %v1210 = vmul.f32 %v1181, 1.442695
        %v1211 = vpow.pop %v1210
        %v1212 = vmul.f32 %v1182, 1.442695
        %v1213 = vpow.pop %v1212
        %v1214 = vmul.f32 %v1183, 1.442695
        %v1215 = vpow.pop %v1214
        %v1216 = vadd.f32 %v1185, 2.0
        %v1217 = vadd.f32 %v1187, 2.0
        %v1218 = vadd.f32 %v1189, 2.0
        %v1219 = vadd.f32 %v1191, 2.0
        %v1220 = vadd.f32 %v1193, 2.0
        %v1221 = vadd.f32 %v1195, 2.0
        %v1222 = vadd.f32 %v1197, 2.0
        %v1223 = vadd.f32 %v1199, 2.0
        %v1224 = vadd.f32 %v1201, 2.0
        %v1225 = vadd.f32 %v1203, 2.0
        %v1226 = vadd.f32 %v1205, 2.0
        %v1227 = vadd.f32 %v1207, 2.0
        %v1228 = vadd.f32 %v1209, 2.0
        %v1229 = vadd.f32 %v1211, 2.0
        %v1230 = vadd.f32 %v1213, 2.0
        %v1231 = vadd.f32 %v1215, 2.0
        %v1232 = vmul.f32 %v1185, %v1216
        %v1233 = vmul.f32 %v1187, %v1217
        %v1234 = vmul.f32 %v1189, %v1218
        %v1235 = vmul.f32 %v1191, %v1219
        %v1236 = vmul.f32 %v1193, %v1220
        %v1237 = vmul.f32 %v1195, %v1221
        %v1238 = vmul.f32 %v1197, %v1222
        %v1239 = vmul.f32 %v1199, %v1223
        %v1240 = vmul.f32 %v1201, %v1224
        %v1241 = vmul.f32 %v1203, %v1225
        %v1242 = vmul.f32 %v1205, %v1226
        %v1243 = vmul.f32 %v1207, %v1227
        %v1244 = vmul.f32 %v1209, %v1228
        %v1245 = vmul.f32 %v1211, %v1229
        %v1246 = vmul.f32 %v1213, %v1230
        %v1247 = vmul.f32 %v1215, %v1231
        %v1248 = vadd.f32 %v1232, 2.0
        %v1249 = vadd.f32 %v1233, 2.0
        %v1250 = vadd.f32 %v1234, 2.0
        %v1251 = vadd.f32 %v1235, 2.0
        %v1252 = vadd.f32 %v1236, 2.0
        %v1253 = vadd.f32 %v1237, 2.0
        %v1254 = vadd.f32 %v1238, 2.0
        %v1255 = vadd.f32 %v1239, 2.0
        %v1256 = vadd.f32 %v1240, 2.0
        %v1257 = vadd.f32 %v1241, 2.0
        %v1258 = vadd.f32 %v1242, 2.0
        %v1259 = vadd.f32 %v1243, 2.0
        %v1260 = vadd.f32 %v1244, 2.0
        %v1261 = vadd.f32 %v1245, 2.0
        %v1262 = vadd.f32 %v1246, 2.0
        %v1263 = vadd.f32 %v1247, 2.0
        %v1264 = vrcp.pop %v1248
        %v1265 = vrcp.pop %v1249
        %v1266 = vrcp.pop %v1250
        %v1267 = vrcp.pop %v1251
        %v1268 = vrcp.pop %v1252
        %v1269 = vrcp.pop %v1253
        %v1270 = vrcp.pop %v1254
        %v1271 = vrcp.pop %v1255
        %v1272 = vrcp.pop %v1256
        %v1273 = vrcp.pop %v1257
        %v1274 = vrcp.pop %v1258
        %v1275 = vrcp.pop %v1259
        %v1276 = vrcp.pop %v1260
        %v1277 = vrcp.pop %v1261
        %v1278 = vrcp.pop %v1262
        %v1279 = vrcp.pop %v1263
        %v1280 = vmul.f32 %v1248, %v1264
        %v1281 = vmul.f32 %v1249, %v1265
        %v1282 = vmul.f32 %v1250, %v1266
        %v1283 = vmul.f32 %v1251, %v1267
        %v1284 = vmul.f32 %v1252, %v1268
        %v1285 = vmul.f32 %v1253, %v1269
        %v1286 = vmul.f32 %v1254, %v1270
        %v1287 = vmul.f32 %v1255, %v1271
        %v1288 = vmul.f32 %v1256, %v1272
        %v1289 = vmul.f32 %v1257, %v1273
        %v1290 = vmul.f32 %v1258, %v1274
        %v1291 = vmul.f32 %v1259, %v1275
        %v1292 = vmul.f32 %v1260, %v1276
        %v1293 = vmul.f32 %v1261, %v1277
        %v1294 = vmul.f32 %v1262, %v1278
        %v1295 = vmul.f32 %v1263, %v1279
        %v1296 = vsub.f32 2.0, %v1280
        %v1297 = vsub.f32 2.0, %v1281
        %v1298 = vsub.f32 2.0, %v1282
        %v1299 = vsub.f32 2.0, %v1283
        %v1300 = vsub.f32 2.0, %v1284
        %v1301 = vsub.f32 2.0, %v1285
        %v1302 = vsub.f32 2.0, %v1286
        %v1303 = vsub.f32 2.0, %v1287
        %v1304 = vsub.f32 2.0, %v1288
        %v1305 = vsub.f32 2.0, %v1289
        %v1306 = vsub.f32 2.0, %v1290
        %v1307 = vsub.f32 2.0, %v1291
        %v1308 = vsub.f32 2.0, %v1292
        %v1309 = vsub.f32 2.0, %v1293
        %v1310 = vsub.f32 2.0, %v1294
        %v1311 = vsub.f32 2.0, %v1295
        %v1312 = vmul.f32 %v1264, %v1296
        %v1313 = vmul.f32 %v1265, %v1297
        %v1314 = vmul.f32 %v1266, %v1298
        %v1315 = vmul.f32 %v1267, %v1299
        %v1316 = vmul.f32 %v1268, %v1300
        %v1317 = vmul.f32 %v1269, %v1301
        %v1318 = vmul.f32 %v1270, %v1302
        %v1319 = vmul.f32 %v1271, %v1303
        %v1320 = vmul.f32 %v1272, %v1304
        %v1321 = vmul.f32 %v1273, %v1305
        %v1322 = vmul.f32 %v1274, %v1306
        %v1323 = vmul.f32 %v1275, %v1307
        %v1324 = vmul.f32 %v1276, %v1308
        %v1325 = vmul.f32 %v1277, %v1309
        %v1326 = vmul.f32 %v1278, %v1310
        %v1327 = vmul.f32 %v1279, %v1311
        %v1328 = vmul.f32 %v1090, %v1232
        %v1329 = vmul.f32 %v1095, %v1233
        %v1330 = vmul.f32 %v1100, %v1234
        %v1331 = vmul.f32 %v1105, %v1235
        %v1332 = vmul.f32 %v1110, %v1236
        %v1333 = vmul.f32 %v1115, %v1237
        %v1334 = vmul.f32 %v1120, %v1238
        %v1335 = vmul.f32 %v1125, %v1239
        %v1336 = vmul.f32 %v1130, %v1240
        %v1337 = vmul.f32 %v1135, %v1241
        %v1338 = vmul.f32 %v1140, %v1242
        %v1339 = vmul.f32 %v1145, %v1243
        %v1340 = vmul.f32 %v1150, %v1244
        %v1341 = vmul.f32 %v1155, %v1245
        %v1342 = vmul.f32 %v1160, %v1246
        %v1343 = vmul.f32 %v1165, %v1247
        %v1344 = vmul.f32 %v1328, %v1312
        %v1345 = vmul.f32 %v1329, %v1313
        %v1346 = vmul.f32 %v1330, %v1314
        %v1347 = vmul.f32 %v1331, %v1315
        %v1348 = vmul.f32 %v1332, %v1316
        %v1349 = vmul.f32 %v1333, %v1317
        %v1350 = vmul.f32 %v1334, %v1318
        %v1351 = vmul.f32 %v1335, %v1319
        %v1352 = vmul.f32 %v1336, %v1320
        %v1353 = vmul.f32 %v1337, %v1321
        %v1354 = vmul.f32 %v1338, %v1322
        %v1355 = vmul.f32 %v1339, %v1323
        %v1356 = vmul.f32 %v1340, %v1324
        %v1357 = vmul.f32 %v1341, %v1325
        %v1358 = vmul.f32 %v1342, %v1326
        %v1359 = vmul.f32 %v1343, %v1327
        %1360 = vst.msk [vmem:[%s250] sm:$0xff] %vm873, %v1344
        %1361 = vst.msk [vmem:[%s250 + $0x8] sm:$0xff] %vm873, %v1345
        %1362 = vst.msk [vmem:[%s250 + $0x10] sm:$0xff] %vm873, %v1346
        %1363 = vst.msk [vmem:[%s250 + $0x18] sm:$0xff] %vm873, %v1347
        %1364 = vst.msk [vmem:[%s250 + $0x20] sm:$0xff] %vm873, %v1348
        %1365 = vst.msk [vmem:[%s250 + $0x28] sm:$0xff] %vm873, %v1349
        %1366 = vst.msk [vmem:[%s250 + $0x30] sm:$0xff] %vm873, %v1350
        %1367 = vst.msk [vmem:[%s250 + $0x38] sm:$0xff] %vm873, %v1351
        %1368 = vst.msk [vmem:[%s250 + $0x40] sm:$0xff] %vm873, %v1352
        %1369 = vst.msk [vmem:[%s250 + $0x48] sm:$0xff] %vm873, %v1353
        %1370 = vst.msk [vmem:[%s250 + $0x50] sm:$0xff] %vm873, %v1354
        %1371 = vst.msk [vmem:[%s250 + $0x58] sm:$0xff] %vm873, %v1355
        %1372 = vst.msk [vmem:[%s250 + $0x60] sm:$0xff] %vm873, %v1356
        %1373 = vst.msk [vmem:[%s250 + $0x68] sm:$0xff] %vm873, %v1357
        %1374 = vst.msk [vmem:[%s250 + $0x70] sm:$0xff] %vm873, %v1358
        %1375 = vst.msk [vmem:[%s250 + $0x78] sm:$0xff] %vm873, %v1359
        %s1376 = sand.u32 %s140, 1
        %s1377 = scalar_lea.sflag [#allocation3], %s1376
        %s1378 = sand.u32 %s140, 1
        %s1379 = smul.addr %s1378, 128
        %s1380 = scalar_lea.vmem [#allocation2], %s1379
        // Predicated region
        $region37: #{tpu_custom_call.1} parent=35 // pred_check
          %p1381 = pneg %p150
        $region38: #{tpu_custom_call.1} parent=35 // pred_check_branch
          %1383 = sbr.rel (%p1381) target = $region40
        $region39: #{tpu_custom_call.1} parent=35 // pred_region
          %s1384 = smul.u32 8, %s23
          %s1386 = ssub.s32 2048, 2048
          %1387 = vsyncadd %s1377, %s1386
          %s1388 = smul.addr %s1384, 2
          %s1389 = smul.addr %s22, 32
          %s1390 = sadd.s32 %s1388, %s1389
          %s1391 = smul.addr %s1390, 128
          %s1392 = scalar_lea.hbm %s4, %s1391
          %s1393 = sshll.u32 %s1380, 4
          %s1394 = int_to_ptr.vmem [resolvable:$true] %s1393
          %1399 = dma.vmem_to_hbm [thread:$0]  %s1394, 2048, %s1392, %s1377, 128, 128, 8
        $region40: #{tpu_custom_call.1} parent=35 // pred_fallthru
          _
      $region36: #{tpu_custom_call.1} parent=5 // pred_fallthru
        _
      %p1400 = scmp.le.s32.totalorder 2, %s13
      // Predicated region
      $region41: #{tpu_custom_call.1} parent=5 // pred_check
        %p1401 = pneg %p1400
      $region42: #{tpu_custom_call.1} parent=5 // pred_check_branch
        %1403 = sbr.rel (%p1401) target = $region44
      $region43: #{tpu_custom_call.1} parent=5 // pred_region
        %s1404 = ssub.s32 %s13, 2
        // Predicated region
        $region45: #{tpu_custom_call.1} parent=43 // pred_check
          %p1405 = pneg %p156
        $region46: #{tpu_custom_call.1} parent=43 // pred_check_branch
          %1407 = sbr.rel (%p1405) target = $region48
        $region47: #{tpu_custom_call.1} parent=43 // pred_region
          %s1408 = sand.u32 %s141, 1
          %s1409 = scalar_lea.sflag [#allocation3], %s1408
          %s1410 = sand.u32 %s141, 1
          %s1411 = smul.addr %s1410, 128
          %s1412 = scalar_lea.vmem [#allocation2], %s1411
          %1413 = dma.done %s1409, 2048
        $region48: #{tpu_custom_call.1} parent=43 // pred_fallthru
          _
      $region44: #{tpu_custom_call.1} parent=5 // pred_fallthru
        _
    $region6: #{tpu_custom_call.1} parent=1 // loop_footer
      %s17 = sadd.s32 1, %s13
    $region7: #{tpu_custom_call.1} parent=1 // loop_footer_branch
      %12 = sbr.rel target = $region3
    $region8: #{tpu_custom_call.1} parent=1 // loop_exit
      _
    %1414 = vsyncpa [#allocation3], 1
    %s1415 = scalar_lea.sflag [#allocation3], 1
    %1416 = vsyncpa %s1415, 1

</llo_original>
